<compile_context>
chip_gen: v7x
topology: tpu7x:2x2x1
jax: 0.10.0
libtpu: 0.0.40
codegen_flags: <defaults>
</compile_context>

<pallas_src>
import jax
import jax.numpy as jnp
import numpy as np
from jax import lax
from jax.experimental import pallas as pl
from jax.experimental.pallas import tpu as pltpu


def gmhkg_kernel(u_ref, lp_ref, hp_ref, x_ref, w_ref, f1_ref, f2_ref, b_ref,
                 o_ref):
    u = u_ref[...]

    # xW : [N, Fp]
    xw = jnp.dot(x_ref[...], w_ref[...], preferred_element_type=jnp.float32)

    # c = U.T @ xW, shared by both branches.  dot_general with contracting
    # dims ((0,),(0,)) feeds the MXU transposed without materializing U.T.
    c = lax.dot_general(u, xw,
                        dimension_numbers=(((0,), (0,)), ((), ())),
                        preferred_element_type=jnp.float32)

    # Fused mixing matrix M = diag(f1)@lp + diag(f2)@hp  (exact algebra).
    # Pure VPU work: one mul + one fma per element, hidden under the MXU.
    m = f1_ref[...] * lp_ref[...] + f2_ref[...] * hp_ref[...]

    # Branch-fused node mixing + output projection.
    t = jnp.dot(m, c, preferred_element_type=jnp.float32)
    y = jnp.dot(u, t, preferred_element_type=jnp.float32)

    o_ref[...] = y + b_ref[...]


def _full_spec(shape):
    # Single block covering the whole array, grid=(1,).
    return pl.BlockSpec(shape, lambda i: (0,) * len(shape))


def gmhkg_forward(eigen_vectors, lp, hp, x, W, filter_1, filter_2, bias):
    N = eigen_vectors.shape[0]
    F_in, F_out = W.shape

    # Lane-dense feature axis: pad F_out up to a multiple of 128 so all MXU
    # result tiles and output stores are full-lane (unmasked).  Sliced back
    # after the call.
    F_pad = ((F_out + 127) // 128) * 128
    W_p = jnp.zeros((F_in, F_pad), jnp.float32).at[:, :F_out].set(W)
    b_p = jnp.zeros((1, F_pad), jnp.float32).at[:, :F_out].set(
        bias.reshape(1, F_out))

    # Advisory cost estimate for XLA's scheduler (3 N^2-scale matmuls after
    # the branch fusion + the input projection).
    flops = int(2 * (N * F_in * F_pad + 3 * N * N * F_pad) + 3 * N * N)
    bytes_accessed = int(4 * (3 * N * N + N * F_in + F_in * F_pad
                              + 2 * N + F_pad + N * F_pad))
    cost = pl.CostEstimate(flops=flops, transcendentals=0,
                           bytes_accessed=bytes_accessed)

    out = pl.pallas_call(
        gmhkg_kernel,
        out_shape=jax.ShapeDtypeStruct((N, F_pad), jnp.float32),
        grid=(1,),
        in_specs=[
            _full_spec((N, N)),         # eigen_vectors U
            _full_spec((N, N)),         # lp
            _full_spec((N, N)),         # hp
            _full_spec((N, F_in)),      # x
            _full_spec((F_in, F_pad)),  # W (lane-padded)
            _full_spec((N, 1)),         # filter_1
            _full_spec((N, 1)),         # filter_2
            _full_spec((1, F_pad)),     # bias (lane-padded)
        ],
        out_specs=_full_spec((N, F_pad)),
        compiler_params=pltpu.CompilerParams(
            dimension_semantics=("arbitrary",)),
        cost_estimate=cost,
    )(eigen_vectors, lp, hp, x, W_p, filter_1, filter_2, b_p)

    return out[:, :F_out]


def gmhkg_reference_f64(eigen_vectors, lp, hp, x, W, filter_1, filter_2,
                        bias):
    """Reference in float64 numpy, exact PyTorch-module operation order."""
    U = np.asarray(eigen_vectors, np.float64)
    lp = np.asarray(lp, np.float64)
    hp = np.asarray(hp, np.float64)
    x = np.asarray(x, np.float64)
    W = np.asarray(W, np.float64)
    f1 = np.asarray(filter_1, np.float64)
    f2 = np.asarray(filter_2, np.float64)
    b = np.asarray(bias, np.float64)

    xw = x @ W
    x1 = lp @ U.T
    x1 = x1 @ xw
    x1 = f1 * x1
    x1 = U @ x1
    x2 = hp @ U.T
    x2 = x2 @ xw
    x2 = f2 * x2
    x2 = U @ x2
    return x1 + x2 + b[None, :]


if __name__ == "__main__":
    # Small shapes consistent with the module:
    # num_nodes=64, in_features=32, out_features=16
    N, F_IN, F_OUT = 64, 32, 16

    key = jax.random.PRNGKey(0)
    k_u, k_lp, k_hp, k_x, k_w, k_f1, k_f2 = jax.random.split(key, 7)

    # Inputs
    eigen_vectors = jax.random.normal(k_u, (N, N), dtype=jnp.float32)
    lp = jax.random.normal(k_lp, (N, N), dtype=jnp.float32)
    hp = jax.random.normal(k_hp, (N, N), dtype=jnp.float32)
    x = jax.random.normal(k_x, (N, F_IN), dtype=jnp.float32)

    # Parameters (mirroring reset_parameters):
    #   W: xavier_uniform, filter_1 ~ U(0.9, 1.1), filter_2 ~ U(0.6, 0.8), bias = 0
    xav_bound = float(np.sqrt(6.0 / (F_IN + F_OUT)))
    W = jax.random.uniform(k_w, (F_IN, F_OUT), dtype=jnp.float32,
                           minval=-xav_bound, maxval=xav_bound)
    filter_1 = jax.random.uniform(k_f1, (N, 1), dtype=jnp.float32,
                                  minval=0.9, maxval=1.1)
    filter_2 = jax.random.uniform(k_f2, (N, 1), dtype=jnp.float32,
                                  minval=0.6, maxval=0.8)
    bias = jnp.zeros((F_OUT,), dtype=jnp.float32)

    out = gmhkg_forward(eigen_vectors, lp, hp, x, W, filter_1, filter_2, bias)
    out = jax.block_until_ready(out)

    # Compare against an fp64 reference.  Output magnitudes are O(1e3) after
    # three N=64 f32 contractions, so the achievable accuracy of ANY f32
    # evaluation order (including the original PyTorch order in f32) is a few
    # 1e-3 absolute; use a tolerance that reflects f32 accumulation, not the
    # exact summation order.
    ref = gmhkg_reference_f64(eigen_vectors, lp, hp, x, W, filter_1, filter_2,
                              bias)
    np.testing.assert_allclose(np.asarray(out, np.float64), ref,
                               rtol=1e-3, atol=1e-2)
    print("KERNEL_OK")
</pallas_src>

<mosaic_0001>
module attributes {stable_mosaic.version = 11 : i64} {
  func.func @gmhkg_kernel(%arg0: i32, %arg1: memref<64x64xf32, #tpu.memory_space<vmem>>, %arg2: memref<64x64xf32, #tpu.memory_space<vmem>>, %arg3: memref<64x64xf32, #tpu.memory_space<vmem>>, %arg4: memref<64x32xf32, #tpu.memory_space<vmem>>, %arg5: memref<32x128xf32, #tpu.memory_space<vmem>>, %arg6: memref<64x1xf32, #tpu.memory_space<vmem>>, %arg7: memref<64x1xf32, #tpu.memory_space<vmem>>, %arg8: memref<1x128xf32, #tpu.memory_space<vmem>>, %arg9: memref<64x128xf32, #tpu.memory_space<vmem>>) attributes {dimension_semantics = [#tpu.dimension_semantics<arbitrary>], iteration_bounds = array<i64: 1>, scalar_prefetch = 0 : i64, scratch_operands = 0 : i64, tpu.core_type = #tpu.core_type<tc>, window_params = [{pipeline_mode = #tpu.pipeline_mode<synchronous>, transform_indices = @transform_0, window_bounds = array<i64: 64, 64>}, {pipeline_mode = #tpu.pipeline_mode<synchronous>, transform_indices = @transform_1, window_bounds = array<i64: 64, 64>}, {pipeline_mode = #tpu.pipeline_mode<synchronous>, transform_indices = @transform_2, window_bounds = array<i64: 64, 64>}, {pipeline_mode = #tpu.pipeline_mode<synchronous>, transform_indices = @transform_3, window_bounds = array<i64: 64, 32>}, {pipeline_mode = #tpu.pipeline_mode<synchronous>, transform_indices = @transform_4, window_bounds = array<i64: 32, 128>}, {pipeline_mode = #tpu.pipeline_mode<synchronous>, transform_indices = @transform_5, window_bounds = array<i64: 64, 1>}, {pipeline_mode = #tpu.pipeline_mode<synchronous>, transform_indices = @transform_6, window_bounds = array<i64: 64, 1>}, {pipeline_mode = #tpu.pipeline_mode<synchronous>, transform_indices = @transform_7, window_bounds = array<i64: 1, 128>}, {pipeline_mode = #tpu.pipeline_mode<synchronous>, transform_indices = @transform_8, window_bounds = array<i64: 64, 128>}]} {
    %c0 = arith.constant 0 : index
    %c0_0 = arith.constant 0 : index
    %0 = vector.load %arg1[%c0, %c0_0] : memref<64x64xf32, #tpu.memory_space<vmem>>, vector<64x64xf32>
    %c0_1 = arith.constant 0 : index
    %c0_2 = arith.constant 0 : index
    %1 = vector.load %arg4[%c0_1, %c0_2] : memref<64x32xf32, #tpu.memory_space<vmem>>, vector<64x32xf32>
    %c0_3 = arith.constant 0 : index
    %c0_4 = arith.constant 0 : index
    %2 = vector.load %arg5[%c0_3, %c0_4] : memref<32x128xf32, #tpu.memory_space<vmem>>, vector<32x128xf32>
    %cst = arith.constant dense<0.000000e+00> : vector<64x128xf32>
    %3 = tpu.matmul %1, %2, %cst {dimension_numbers = #tpu.dot_dimension_numbers<[1], [0], [0], [1], [0, 0, 1, 1], [], []>} : vector<64x32xf32>, vector<32x128xf32>, vector<64x128xf32> -> vector<64x128xf32>
    %cst_5 = arith.constant dense<0.000000e+00> : vector<64x128xf32>
    %4 = tpu.matmul %0, %3, %cst_5 {dimension_numbers = #tpu.dot_dimension_numbers<[0], [0], [1], [1], [0, 1, 1, 1], [], []>} : vector<64x64xf32>, vector<64x128xf32>, vector<64x128xf32> -> vector<64x128xf32>
    %c0_6 = arith.constant 0 : index
    %c0_7 = arith.constant 0 : index
    %5 = vector.load %arg6[%c0_6, %c0_7] : memref<64x1xf32, #tpu.memory_space<vmem>>, vector<64x1xf32>
    %c0_8 = arith.constant 0 : index
    %c0_9 = arith.constant 0 : index
    %6 = vector.load %arg2[%c0_8, %c0_9] : memref<64x64xf32, #tpu.memory_space<vmem>>, vector<64x64xf32>
    %7 = vector.broadcast %5 : vector<64x1xf32> to vector<64x64xf32>
    %8 = arith.mulf %7, %6 : vector<64x64xf32>
    %c0_10 = arith.constant 0 : index
    %c0_11 = arith.constant 0 : index
    %9 = vector.load %arg7[%c0_10, %c0_11] : memref<64x1xf32, #tpu.memory_space<vmem>>, vector<64x1xf32>
    %c0_12 = arith.constant 0 : index
    %c0_13 = arith.constant 0 : index
    %10 = vector.load %arg3[%c0_12, %c0_13] : memref<64x64xf32, #tpu.memory_space<vmem>>, vector<64x64xf32>
    %11 = vector.broadcast %9 : vector<64x1xf32> to vector<64x64xf32>
    %12 = arith.mulf %11, %10 : vector<64x64xf32>
    %13 = arith.addf %8, %12 : vector<64x64xf32>
    %cst_14 = arith.constant dense<0.000000e+00> : vector<64x128xf32>
    %14 = tpu.matmul %13, %4, %cst_14 {dimension_numbers = #tpu.dot_dimension_numbers<[1], [0], [0], [1], [0, 0, 1, 1], [], []>} : vector<64x64xf32>, vector<64x128xf32>, vector<64x128xf32> -> vector<64x128xf32>
    %cst_15 = arith.constant dense<0.000000e+00> : vector<64x128xf32>
    %15 = tpu.matmul %0, %14, %cst_15 {dimension_numbers = #tpu.dot_dimension_numbers<[1], [0], [0], [1], [0, 0, 1, 1], [], []>} : vector<64x64xf32>, vector<64x128xf32>, vector<64x128xf32> -> vector<64x128xf32>
    %c0_16 = arith.constant 0 : index
    %c0_17 = arith.constant 0 : index
    %16 = vector.load %arg8[%c0_16, %c0_17] : memref<1x128xf32, #tpu.memory_space<vmem>>, vector<1x128xf32>
    %17 = vector.broadcast %16 : vector<1x128xf32> to vector<64x128xf32>
    %18 = arith.addf %15, %17 : vector<64x128xf32>
    %c0_18 = arith.constant 0 : index
    %c0_19 = arith.constant 0 : index
    %19 = vector.load %arg9[%c0_18, %c0_19] : memref<64x128xf32, #tpu.memory_space<vmem>>, vector<64x128xf32>
    tpu.vector_store %arg9[%c0_18, %c0_19], %18 {strides = array<i32>} : memref<64x128xf32, #tpu.memory_space<vmem>>, vector<64x128xf32>,
    return
  }
  func.func @transform_0(%arg0: i32) -> (i32, i32) {
    %c0_i32 = arith.constant 0 : i32
    %c0_i32_0 = arith.constant 0 : i32
    %c0_i32_1 = arith.constant 0 : i32
    return %c0_i32, %c0_i32_0 : i32, i32
  }
  func.func @transform_1(%arg0: i32) -> (i32, i32) {
    %c0_i32 = arith.constant 0 : i32
    %c0_i32_0 = arith.constant 0 : i32
    %c0_i32_1 = arith.constant 0 : i32
    return %c0_i32, %c0_i32_0 : i32, i32
  }
  func.func @transform_2(%arg0: i32) -> (i32, i32) {
    %c0_i32 = arith.constant 0 : i32
    %c0_i32_0 = arith.constant 0 : i32
    %c0_i32_1 = arith.constant 0 : i32
    return %c0_i32, %c0_i32_0 : i32, i32
  }
  func.func @transform_3(%arg0: i32) -> (i32, i32) {
    %c0_i32 = arith.constant 0 : i32
    %c0_i32_0 = arith.constant 0 : i32
    %c0_i32_1 = arith.constant 0 : i32
    return %c0_i32, %c0_i32_0 : i32, i32
  }
  func.func @transform_4(%arg0: i32) -> (i32, i32) {
    %c0_i32 = arith.constant 0 : i32
    %c0_i32_0 = arith.constant 0 : i32
    %c0_i32_1 = arith.constant 0 : i32
    return %c0_i32, %c0_i32_0 : i32, i32
  }
  func.func @transform_5(%arg0: i32) -> (i32, i32) {
    %c0_i32 = arith.constant 0 : i32
    %c0_i32_0 = arith.constant 0 : i32
    %c0_i32_1 = arith.constant 0 : i32
    return %c0_i32, %c0_i32_0 : i32, i32
  }
  func.func @transform_6(%arg0: i32) -> (i32, i32) {
    %c0_i32 = arith.constant 0 : i32
    %c0_i32_0 = arith.constant 0 : i32
    %c0_i32_1 = arith.constant 0 : i32
    return %c0_i32, %c0_i32_0 : i32, i32
  }
  func.func @transform_7(%arg0: i32) -> (i32, i32) {
    %c0_i32 = arith.constant 0 : i32
    %c0_i32_0 = arith.constant 0 : i32
    %c0_i32_1 = arith.constant 0 : i32
    return %c0_i32, %c0_i32_0 : i32, i32
  }
  func.func @transform_8(%arg0: i32) -> (i32, i32) {
    %c0_i32 = arith.constant 0 : i32
    %c0_i32_0 = arith.constant 0 : i32
    %c0_i32_1 = arith.constant 0 : i32
    return %c0_i32, %c0_i32_0 : i32, i32
  }
}

</mosaic_0001>

<llo_original>
// kernel: tpu_custom_call.1
$region0: #{tpu_custom_call.1}
  #allocation0 [shape = 'u32[]', space=smem, size = 0x4, offset = 0x4, fixed_abs, tag = 'smem constant byte address 0x4 - core index']
  #allocation1 [shape = 'u32[144,128]{1,0:T(1,128)}', space=vmem, size = 0x12000, scoped, tag = 'internal scratch']
  %s0 = inlined_call_operand.vmem [shape: f32[64,64], index: 0, kind: input, shape index: {}]
  %s1 = inlined_call_operand.vmem [shape: f32[64,64], index: 1, kind: input, shape index: {}]
  %s2 = inlined_call_operand.vmem [shape: f32[64,64], index: 2, kind: input, shape index: {}]
  %s3 = inlined_call_operand.vmem [shape: f32[64,32], index: 3, kind: input, shape index: {}]
  %s4 = inlined_call_operand.vmem [shape: f32[32,128], index: 4, kind: input, shape index: {}]
  %s5 = inlined_call_operand.vmem [shape: f32[64,1], index: 5, kind: input, shape index: {}]
  %s6 = inlined_call_operand.vmem [shape: f32[64,1], index: 6, kind: input, shape index: {}]
  %s7 = inlined_call_operand.vmem [shape: f32[1,128], index: 7, kind: input, shape index: {}]
  %s8 = inlined_call_operand.hbm [shape: f32[64,128], index: 8, kind: output, shape index: {}]
  %s9 = sld [smem:[#allocation0]]
  $region42: #{tpu_custom_call.1} parent=0
    _
  %s11 = ssub.s32 1, %s9
  %s12 = scalar_select 0, %s11, %s9
  $region1: #{tpu_custom_call.1} parent=0
    #allocation2 [shape = 'u8[32768]{0}', space=vmem, size = 0x8000, scoped, tag = 'output window, operand 0, single buffered']
    #allocation3 [shape = 's32[1]{0}', space=sflag, size = 0x4, scoped, tag = 'scoped memory for tpu_custom_call.1']
    %13 = vsyncpa [#allocation3], 0
    // Predicated region
    $region2: #{tpu_custom_call.1} parent=1 // pred_check
      _
    $region3: #{tpu_custom_call.1} parent=1 // pred_check_branch
      %15 = sbr.rel (0) target = $region5
    $region4: #{tpu_custom_call.1} parent=1 // pred_region
      _
    $region5: #{tpu_custom_call.1} parent=1 // pred_fallthru
      _
    // Predicated region
    $region6: #{tpu_custom_call.1} parent=1 // pred_check
      _
    $region7: #{tpu_custom_call.1} parent=1 // pred_check_branch
      %17 = sbr.rel (0) target = $region9
    $region8: #{tpu_custom_call.1} parent=1 // pred_region
      _
    $region9: #{tpu_custom_call.1} parent=1 // pred_fallthru
      _
    // Predicated region
    $region10: #{tpu_custom_call.1} parent=1 // pred_check
      _
    $region11: #{tpu_custom_call.1} parent=1 // pred_check_branch
      %19 = sbr.rel (0) target = $region13
    $region12: #{tpu_custom_call.1} parent=1 // pred_region
      _
    $region13: #{tpu_custom_call.1} parent=1 // pred_fallthru
      _
    // Predicated region
    $region14: #{tpu_custom_call.1} parent=1 // pred_check
      _
    $region15: #{tpu_custom_call.1} parent=1 // pred_check_branch
      %21 = sbr.rel (0) target = $region17
    $region16: #{tpu_custom_call.1} parent=1 // pred_region
      _
    $region17: #{tpu_custom_call.1} parent=1 // pred_fallthru
      _
    // Predicated region
    $region18: #{tpu_custom_call.1} parent=1 // pred_check
      _
    $region19: #{tpu_custom_call.1} parent=1 // pred_check_branch
      %23 = sbr.rel (0) target = $region21
    $region20: #{tpu_custom_call.1} parent=1 // pred_region
      _
    $region21: #{tpu_custom_call.1} parent=1 // pred_fallthru
      _
    // Predicated region
    $region22: #{tpu_custom_call.1} parent=1 // pred_check
      _
    $region23: #{tpu_custom_call.1} parent=1 // pred_check_branch
      %25 = sbr.rel (0) target = $region25
    $region24: #{tpu_custom_call.1} parent=1 // pred_region
      _
    $region25: #{tpu_custom_call.1} parent=1 // pred_fallthru
      _
    // Predicated region
    $region26: #{tpu_custom_call.1} parent=1 // pred_check
      _
    $region27: #{tpu_custom_call.1} parent=1 // pred_check_branch
      %27 = sbr.rel (0) target = $region29
    $region28: #{tpu_custom_call.1} parent=1 // pred_region
      _
    $region29: #{tpu_custom_call.1} parent=1 // pred_fallthru
      _
    // Predicated region
    $region30: #{tpu_custom_call.1} parent=1 // pred_check
      _
    $region31: #{tpu_custom_call.1} parent=1 // pred_check_branch
      %29 = sbr.rel (0) target = $region33
    $region32: #{tpu_custom_call.1} parent=1 // pred_region
      _
    $region33: #{tpu_custom_call.1} parent=1 // pred_fallthru
      _
    %v30 = vld [vmem:[%s0] sm:$0xff]
    %v31 = vld [vmem:[%s0 + $0x8] sm:$0xff]
    %v32 = vld [vmem:[%s0 + $0x10] sm:$0xff]
    %v33 = vld [vmem:[%s0 + $0x18] sm:$0xff]
    %v34 = vld [vmem:[%s0 + $0x20] sm:$0xff]
    %v35 = vld [vmem:[%s0 + $0x28] sm:$0xff]
    %v36 = vld [vmem:[%s0 + $0x30] sm:$0xff]
    %v37 = vld [vmem:[%s0 + $0x38] sm:$0xff]
    %v38 = vld [vmem:[%s3] sm:$0xff]
    %v39 = vld [vmem:[%s3 + $0x8] sm:$0xff]
    %v40 = vld [vmem:[%s3 + $0x10] sm:$0xff]
    %v41 = vld [vmem:[%s3 + $0x18] sm:$0xff]
    %v42 = vld [vmem:[%s3 + $0x20] sm:$0xff]
    %v43 = vld [vmem:[%s3 + $0x28] sm:$0xff]
    %v44 = vld [vmem:[%s3 + $0x30] sm:$0xff]
    %v45 = vld [vmem:[%s3 + $0x38] sm:$0xff]
    %v46 = vld [vmem:[%s4] sm:$0xff]
    %v47 = vld [vmem:[%s4 + $0x8] sm:$0xff]
    %v48 = vld [vmem:[%s4 + $0x10] sm:$0xff]
    %v49 = vld [vmem:[%s4 + $0x18] sm:$0xff]
    %vm50 = vcmask 261120
    %v52 = vsel %vm50, %v38, 0
    %v55 = vsel %vm50, %v39, 0
    %v58 = vsel %vm50, %v40, 0
    %v61 = vsel %vm50, %v41, 0
    %v64 = vsel %vm50, %v42, 0
    %v67 = vsel %vm50, %v43, 0
    %v70 = vsel %vm50, %v44, 0
    %v73 = vsel %vm50, %v45, 0
    %75 = vmatprep.subr.mxu0 0.0
    %76 = vmatpush1.msra.mxu0 %v46
    %77 = vmatprep.subr.mxu0 0.0
    %78 = vmatpush1.msra.mxu0 %v47
    %79 = vmatprep.subr.mxu0 0.0
    %80 = vmatpush1.msra.mxu0 %v48
    %81 = vmatprep.subr.mxu0 0.0
    %82 = vmatpush1.msra.mxu0 %v49
    %83 = vmatprep.subr.mxu0 0.0
    %84 = vmatpush1.msra.mxu0 0.0
    %85 = vmatprep.subr.mxu0 0.0
    %86 = vmatpush1.msra.mxu0 0.0
    %87 = vmatprep.subr.mxu0 0.0
    %88 = vmatpush1.msra.mxu0 0.0
    %89 = vmatprep.subr.mxu0 0.0
    %90 = vmatpush1.msra.mxu0 0.0
    %91 = vmatprep.subr.mxu0 0.0
    %92 = vmatpush1.msra.mxu0 0.0
    %93 = vmatprep.subr.mxu0 0.0
    %94 = vmatpush1.msra.mxu0 0.0
    %95 = vmatprep.subr.mxu0 0.0
    %96 = vmatpush1.msra.mxu0 0.0
    %97 = vmatprep.subr.mxu0 0.0
    %98 = vmatpush1.msra.mxu0 0.0
    %99 = vmatprep.subr.mxu0 0.0
    %100 = vmatpush1.msra.mxu0 0.0
    %101 = vmatprep.subr.mxu0 0.0
    %102 = vmatpush1.msra.mxu0 0.0
    %103 = vmatprep.subr.mxu0 0.0
    %104 = vmatpush1.msra.mxu0 0.0
    %105 = vmatprep.subr.mxu0 0.0
    %106 = vmatpush1.msra.mxu0 0.0
    %107 = vmatprep.subr.mxu0 0.0
    %108 = vmatpush1.msra.mxu0 0.0
    %109 = vmatprep.subr.mxu0 0.0
    %110 = vmatpush1.msra.mxu0 0.0
    %111 = vmatprep.subr.mxu0 0.0
    %112 = vmatpush1.msra.mxu0 0.0
    %113 = vmatprep.subr.mxu0 0.0
    %114 = vmatpush1.msra.mxu0 0.0
    %115 = vmatprep.subr.mxu0 0.0
    %116 = vmatpush1.msra.mxu0 0.0
    %117 = vmatprep.subr.mxu0 0.0
    %118 = vmatpush1.msra.mxu0 0.0
    %119 = vmatprep.subr.mxu0 0.0
    %120 = vmatpush1.msra.mxu0 0.0
    %121 = vmatprep.subr.mxu0 0.0
    %122 = vmatpush1.msra.mxu0 0.0
    %123 = vmatprep.subr.mxu0 0.0
    %124 = vmatpush1.msra.mxu0 0.0
    %125 = vmatprep.subr.mxu0 0.0
    %126 = vmatpush1.msra.mxu0 0.0
    %127 = vmatprep.subr.mxu0 0.0
    %128 = vmatpush1.msra.mxu0 0.0
    %129 = vmatprep.subr.mxu0 0.0
    %130 = vmatpush1.msra.mxu0 0.0
    %131 = vmatprep.subr.mxu0 0.0
    %132 = vmatpush1.msra.mxu0 0.0
    %133 = vmatprep.subr.mxu0 0.0
    %134 = vmatpush1.msra.mxu0 0.0
    %135 = vmatprep.subr.mxu0 0.0
    %136 = vmatpush1.msra.mxu0 0.0
    %137 = vmatprep.subr.mxu0 0.0
    %138 = vmatpush1.msra.mxu0 0.0
    %139 = vmatprep.mubr.f32.mxu0 0.0
    %140 = vmatmul.mubr.f32.gmra.mrb[0].mxu0 %v52
    %v141 = vpop.f32.mrb[0].mxu0
    %v142 = vadd.f32 0.0, %v141
    %v143 = vpop.f32.mrb[0].mxu0
    %144 = vmatprep.mubr.f32.mxu0 0.0
    %145 = vmatmul.mubr.f32.gmra.mrb[0].mxu0 %v55
    %v146 = vpop.f32.mrb[0].mxu0
    %v147 = vadd.f32 0.0, %v146
    %v148 = vpop.f32.mrb[0].mxu0
    %149 = vmatprep.mubr.f32.mxu0 0.0
    %150 = vmatmul.mubr.f32.gmra.mrb[0].mxu0 %v58
    %v151 = vpop.f32.mrb[0].mxu0
    %v152 = vadd.f32 0.0, %v151
    %v153 = vpop.f32.mrb[0].mxu0
    %154 = vmatprep.mubr.f32.mxu0 0.0
    %155 = vmatmul.mubr.f32.gmra.mrb[0].mxu0 %v61
    %v156 = vpop.f32.mrb[0].mxu0
    %v157 = vadd.f32 0.0, %v156
    %v158 = vpop.f32.mrb[0].mxu0
    %159 = vmatprep.mubr.f32.mxu0 0.0
    %160 = vmatmul.mubr.f32.gmra.mrb[0].mxu0 %v64
    %v161 = vpop.f32.mrb[0].mxu0
    %v162 = vadd.f32 0.0, %v161
    %v163 = vpop.f32.mrb[0].mxu0
    %164 = vmatprep.mubr.f32.mxu0 0.0
    %165 = vmatmul.mubr.f32.gmra.mrb[0].mxu0 %v67
    %v166 = vpop.f32.mrb[0].mxu0
    %v167 = vadd.f32 0.0, %v166
    %v168 = vpop.f32.mrb[0].mxu0
    %169 = vmatprep.mubr.f32.mxu0 0.0
    %170 = vmatmul.mubr.f32.gmra.mrb[0].mxu0 %v70
    %v171 = vpop.f32.mrb[0].mxu0
    %v172 = vadd.f32 0.0, %v171
    %v173 = vpop.f32.mrb[0].mxu0
    %174 = vmatprep.mubr.f32.mxu0 0.0
    %175 = vmatmul.mubr.f32.gmra.mrb[0].mxu0 %v73
    %v176 = vpop.f32.mrb[0].mxu0
    %v177 = vadd.f32 0.0, %v176
    %v178 = vpop.f32.mrb[0].mxu0
    %179 = vdwg.mxu0
    %180 = vxpose.xlu0.b32.start [1/16] %v30, 128
    %181 = vxpose.xlu0.b32.cont [2/16] %v31, 128
    %182 = vxpose.xlu0.b32.cont [3/16] %v32, 128
    %183 = vxpose.xlu0.b32.cont [4/16] %v33, 128
    %184 = vxpose.xlu0.b32.cont [5/16] %v34, 128
    %185 = vxpose.xlu0.b32.cont [6/16] %v35, 128
    %186 = vxpose.xlu0.b32.cont [7/16] %v36, 128
    %187 = vxpose.xlu0.b32.cont [8/16] %v37, 128
    %188 = vxpose.xlu0.b32.cont [9/16] 0.0, 128
    %189 = vxpose.xlu0.b32.cont [10/16] 0.0, 128
    %190 = vxpose.xlu0.b32.cont [11/16] 0.0, 128
    %191 = vxpose.xlu0.b32.cont [12/16] 0.0, 128
    %192 = vxpose.xlu0.b32.cont [13/16] 0.0, 128
    %193 = vxpose.xlu0.b32.cont [14/16] 0.0, 128
    %194 = vxpose.xlu0.b32.cont [15/16] 0.0, 128
    %195 = vxpose.xlu0.b32.end [16/16] 0.0, 128
    %v196 = vpop.trf.xlu0
    %v197 = vpop.trf.xlu0
    %v198 = vpop.trf.xlu0
    %v199 = vpop.trf.xlu0
    %v200 = vpop.trf.xlu0
    %v201 = vpop.trf.xlu0
    %v202 = vpop.trf.xlu0
    %v203 = vpop.trf.xlu0
    %v204 = vpop.trf.xlu0
    %v205 = vpop.trf.xlu0
    %v206 = vpop.trf.xlu0
    %v207 = vpop.trf.xlu0
    %v208 = vpop.trf.xlu0
    %v209 = vpop.trf.xlu0
    %v210 = vpop.trf.xlu0
    %v211 = vpop.trf.xlu0
    %vm212 = vcmask 523264
    %v214 = vsel %vm212, %v196, 0
    %v217 = vsel %vm212, %v197, 0
    %v220 = vsel %vm212, %v198, 0
    %v223 = vsel %vm212, %v199, 0
    %v226 = vsel %vm212, %v200, 0
    %v229 = vsel %vm212, %v201, 0
    %v232 = vsel %vm212, %v202, 0
    %v235 = vsel %vm212, %v203, 0
    %237 = vmatprep.subr.mxu0 0.0
    %238 = vmatpush1.msra.mxu0 %v142
    %239 = vmatprep.subr.mxu0 0.0
    %240 = vmatpush1.msra.mxu0 %v147
    %241 = vmatprep.subr.mxu0 0.0
    %242 = vmatpush1.msra.mxu0 %v152
    %243 = vmatprep.subr.mxu0 0.0
    %244 = vmatpush1.msra.mxu0 %v157
    %245 = vmatprep.subr.mxu0 0.0
    %246 = vmatpush1.msra.mxu0 %v162
    %247 = vmatprep.subr.mxu0 0.0
    %248 = vmatpush1.msra.mxu0 %v167
    %249 = vmatprep.subr.mxu0 0.0
    %250 = vmatpush1.msra.mxu0 %v172
    %251 = vmatprep.subr.mxu0 0.0
    %252 = vmatpush1.msra.mxu0 %v177
    %253 = vmatprep.subr.mxu0 0.0
    %254 = vmatpush1.msra.mxu0 0.0
    %255 = vmatprep.subr.mxu0 0.0
    %256 = vmatpush1.msra.mxu0 0.0
    %257 = vmatprep.subr.mxu0 0.0
    %258 = vmatpush1.msra.mxu0 0.0
    %259 = vmatprep.subr.mxu0 0.0
    %260 = vmatpush1.msra.mxu0 0.0
    %261 = vmatprep.subr.mxu0 0.0
    %262 = vmatpush1.msra.mxu0 0.0
    %263 = vmatprep.subr.mxu0 0.0
    %264 = vmatpush1.msra.mxu0 0.0
    %265 = vmatprep.subr.mxu0 0.0
    %266 = vmatpush1.msra.mxu0 0.0
    %267 = vmatprep.subr.mxu0 0.0
    %268 = vmatpush1.msra.mxu0 0.0
    %269 = vmatprep.subr.mxu0 0.0
    %270 = vmatpush1.msra.mxu0 0.0
    %271 = vmatprep.subr.mxu0 0.0
    %272 = vmatpush1.msra.mxu0 0.0
    %273 = vmatprep.subr.mxu0 0.0
    %274 = vmatpush1.msra.mxu0 0.0
    %275 = vmatprep.subr.mxu0 0.0
    %276 = vmatpush1.msra.mxu0 0.0
    %277 = vmatprep.subr.mxu0 0.0
    %278 = vmatpush1.msra.mxu0 0.0
    %279 = vmatprep.subr.mxu0 0.0
    %280 = vmatpush1.msra.mxu0 0.0
    %281 = vmatprep.subr.mxu0 0.0
    %282 = vmatpush1.msra.mxu0 0.0
    %283 = vmatprep.subr.mxu0 0.0
    %284 = vmatpush1.msra.mxu0 0.0
    %285 = vmatprep.subr.mxu0 0.0
    %286 = vmatpush1.msra.mxu0 0.0
    %287 = vmatprep.subr.mxu0 0.0
    %288 = vmatpush1.msra.mxu0 0.0
    %289 = vmatprep.subr.mxu0 0.0
    %290 = vmatpush1.msra.mxu0 0.0
    %291 = vmatprep.subr.mxu0 0.0
    %292 = vmatpush1.msra.mxu0 0.0
    %293 = vmatprep.subr.mxu0 0.0
    %294 = vmatpush1.msra.mxu0 0.0
    %295 = vmatprep.subr.mxu0 0.0
    %296 = vmatpush1.msra.mxu0 0.0
    %297 = vmatprep.subr.mxu0 0.0
    %298 = vmatpush1.msra.mxu0 0.0
    %299 = vmatprep.subr.mxu0 0.0
    %300 = vmatpush1.msra.mxu0 0.0
    %301 = vmatprep.mubr.f32.mxu0 0.0
    %302 = vmatmul.mubr.f32.gmra.mrb[0].mxu0 %v214
    %v303 = vpop.f32.mrb[0].mxu0
    %v304 = vadd.f32 0.0, %v303
    %v305 = vpop.f32.mrb[0].mxu0
    %306 = vmatprep.mubr.f32.mxu0 0.0
    %307 = vmatmul.mubr.f32.gmra.mrb[0].mxu0 %v217
    %v308 = vpop.f32.mrb[0].mxu0
    %v309 = vadd.f32 0.0, %v308
    %v310 = vpop.f32.mrb[0].mxu0
    %311 = vmatprep.mubr.f32.mxu0 0.0
    %312 = vmatmul.mubr.f32.gmra.mrb[0].mxu0 %v220
    %v313 = vpop.f32.mrb[0].mxu0
    %v314 = vadd.f32 0.0, %v313
    %v315 = vpop.f32.mrb[0].mxu0
    %316 = vmatprep.mubr.f32.mxu0 0.0
    %317 = vmatmul.mubr.f32.gmra.mrb[0].mxu0 %v223
    %v318 = vpop.f32.mrb[0].mxu0
    %v319 = vadd.f32 0.0, %v318
    %v320 = vpop.f32.mrb[0].mxu0
    %321 = vmatprep.mubr.f32.mxu0 0.0
    %322 = vmatmul.mubr.f32.gmra.mrb[0].mxu0 %v226
    %v323 = vpop.f32.mrb[0].mxu0
    %v324 = vadd.f32 0.0, %v323
    %v325 = vpop.f32.mrb[0].mxu0
    %326 = vmatprep.mubr.f32.mxu0 0.0
    %327 = vmatmul.mubr.f32.gmra.mrb[0].mxu0 %v229
    %v328 = vpop.f32.mrb[0].mxu0
    %v329 = vadd.f32 0.0, %v328
    %v330 = vpop.f32.mrb[0].mxu0
    %331 = vmatprep.mubr.f32.mxu0 0.0
    %332 = vmatmul.mubr.f32.gmra.mrb[0].mxu0 %v232
    %v333 = vpop.f32.mrb[0].mxu0
    %v334 = vadd.f32 0.0, %v333
    %v335 = vpop.f32.mrb[0].mxu0
    %336 = vmatprep.mubr.f32.mxu0 0.0
    %337 = vmatmul.mubr.f32.gmra.mrb[0].mxu0 %v235
    %v338 = vpop.f32.mrb[0].mxu0
    %v339 = vadd.f32 0.0, %v338
    %v340 = vpop.f32.mrb[0].mxu0
    %341 = vdwg.mxu0
    %v342 = vld [vmem:[%s5] sm:$0xff]
    %v343 = vld [vmem:[%s5 + $0x8] sm:$0xff]
    %v344 = vld [vmem:[%s5 + $0x10] sm:$0xff]
    %v345 = vld [vmem:[%s5 + $0x18] sm:$0xff]
    %v346 = vld [vmem:[%s5 + $0x20] sm:$0xff]
    %v347 = vld [vmem:[%s5 + $0x28] sm:$0xff]
    %v348 = vld [vmem:[%s5 + $0x30] sm:$0xff]
    %v349 = vld [vmem:[%s5 + $0x38] sm:$0xff]
    %v350 = vld [vmem:[%s1] sm:$0xff]
    %v351 = vld [vmem:[%s1 + $0x8] sm:$0xff]
    %v352 = vld [vmem:[%s1 + $0x10] sm:$0xff]
    %v353 = vld [vmem:[%s1 + $0x18] sm:$0xff]
    %v354 = vld [vmem:[%s1 + $0x20] sm:$0xff]
    %v355 = vld [vmem:[%s1 + $0x28] sm:$0xff]
    %v356 = vld [vmem:[%s1 + $0x30] sm:$0xff]
    %v357 = vld [vmem:[%s1 + $0x38] sm:$0xff]
    %359 = vset.pattern.permute.xlu0 0
    %360 = vperm.xlu0 %359, %v342
    %v361 = vpop.permute.xlu0 %360
    %364 = vset.pattern.permute.xlu0 0
    %365 = vperm.xlu0 %364, %v343
    %v366 = vpop.permute.xlu0 %365
    %369 = vset.pattern.permute.xlu0 0
    %370 = vperm.xlu0 %369, %v344
    %v371 = vpop.permute.xlu0 %370
    %374 = vset.pattern.permute.xlu0 0
    %375 = vperm.xlu0 %374, %v345
    %v376 = vpop.permute.xlu0 %375
    %379 = vset.pattern.permute.xlu0 0
    %380 = vperm.xlu0 %379, %v346
    %v381 = vpop.permute.xlu0 %380
    %384 = vset.pattern.permute.xlu0 0
    %385 = vperm.xlu0 %384, %v347
    %v386 = vpop.permute.xlu0 %385
    %389 = vset.pattern.permute.xlu0 0
    %390 = vperm.xlu0 %389, %v348
    %v391 = vpop.permute.xlu0 %390
    %394 = vset.pattern.permute.xlu0 0
    %395 = vperm.xlu0 %394, %v349
    %v396 = vpop.permute.xlu0 %395
    %v398 = vmul.f32 %v361, %v350
    %v399 = vmul.f32 %v366, %v351
    %v400 = vmul.f32 %v371, %v352
    %v401 = vmul.f32 %v376, %v353
    %v402 = vmul.f32 %v381, %v354
    %v403 = vmul.f32 %v386, %v355
    %v404 = vmul.f32 %v391, %v356
    %v405 = vmul.f32 %v396, %v357
    %v406 = vld [vmem:[%s6] sm:$0xff]
    %v407 = vld [vmem:[%s6 + $0x8] sm:$0xff]
    %v408 = vld [vmem:[%s6 + $0x10] sm:$0xff]
    %v409 = vld [vmem:[%s6 + $0x18] sm:$0xff]
    %v410 = vld [vmem:[%s6 + $0x20] sm:$0xff]
    %v411 = vld [vmem:[%s6 + $0x28] sm:$0xff]
    %v412 = vld [vmem:[%s6 + $0x30] sm:$0xff]
    %v413 = vld [vmem:[%s6 + $0x38] sm:$0xff]
    %v414 = vld [vmem:[%s2] sm:$0xff]
    %v415 = vld [vmem:[%s2 + $0x8] sm:$0xff]
    %v416 = vld [vmem:[%s2 + $0x10] sm:$0xff]
    %v417 = vld [vmem:[%s2 + $0x18] sm:$0xff]
    %v418 = vld [vmem:[%s2 + $0x20] sm:$0xff]
    %v419 = vld [vmem:[%s2 + $0x28] sm:$0xff]
    %v420 = vld [vmem:[%s2 + $0x30] sm:$0xff]
    %v421 = vld [vmem:[%s2 + $0x38] sm:$0xff]
    %423 = vset.pattern.permute.xlu0 0
    %424 = vperm.xlu0 %423, %v406
    %v425 = vpop.permute.xlu0 %424
    %428 = vset.pattern.permute.xlu0 0
    %429 = vperm.xlu0 %428, %v407
    %v430 = vpop.permute.xlu0 %429
    %433 = vset.pattern.permute.xlu0 0
    %434 = vperm.xlu0 %433, %v408
    %v435 = vpop.permute.xlu0 %434
    %438 = vset.pattern.permute.xlu0 0
    %439 = vperm.xlu0 %438, %v409
    %v440 = vpop.permute.xlu0 %439
    %443 = vset.pattern.permute.xlu0 0
    %444 = vperm.xlu0 %443, %v410
    %v445 = vpop.permute.xlu0 %444
    %448 = vset.pattern.permute.xlu0 0
    %449 = vperm.xlu0 %448, %v411
    %v450 = vpop.permute.xlu0 %449
    %453 = vset.pattern.permute.xlu0 0
    %454 = vperm.xlu0 %453, %v412
    %v455 = vpop.permute.xlu0 %454
    %458 = vset.pattern.permute.xlu0 0
    %459 = vperm.xlu0 %458, %v413
    %v460 = vpop.permute.xlu0 %459
    %v462 = vmul.f32 %v425, %v414
    %v463 = vmul.f32 %v430, %v415
    %v464 = vmul.f32 %v435, %v416
    %v465 = vmul.f32 %v440, %v417
    %v466 = vmul.f32 %v445, %v418
    %v467 = vmul.f32 %v450, %v419
    %v468 = vmul.f32 %v455, %v420
    %v469 = vmul.f32 %v460, %v421
    %v470 = vadd.f32 %v398, %v462
    %v471 = vadd.f32 %v399, %v463
    %v472 = vadd.f32 %v400, %v464
    %v473 = vadd.f32 %v401, %v465
    %v474 = vadd.f32 %v402, %v466
    %v475 = vadd.f32 %v403, %v467
    %v476 = vadd.f32 %v404, %v468
    %v477 = vadd.f32 %v405, %v469
    %v479 = vsel %vm212, %v470, 0
    %v482 = vsel %vm212, %v471, 0
    %v485 = vsel %vm212, %v472, 0
    %v488 = vsel %vm212, %v473, 0
    %v491 = vsel %vm212, %v474, 0
    %v494 = vsel %vm212, %v475, 0
    %v497 = vsel %vm212, %v476, 0
    %v500 = vsel %vm212, %v477, 0
    %502 = vmatprep.subr.mxu0 0.0
    %503 = vmatpush1.msra.mxu0 %v304
    %504 = vmatprep.subr.mxu0 0.0
    %505 = vmatpush1.msra.mxu0 %v309
    %506 = vmatprep.subr.mxu0 0.0
    %507 = vmatpush1.msra.mxu0 %v314
    %508 = vmatprep.subr.mxu0 0.0
    %509 = vmatpush1.msra.mxu0 %v319
    %510 = vmatprep.subr.mxu0 0.0
    %511 = vmatpush1.msra.mxu0 %v324
    %512 = vmatprep.subr.mxu0 0.0
    %513 = vmatpush1.msra.mxu0 %v329
    %514 = vmatprep.subr.mxu0 0.0
    %515 = vmatpush1.msra.mxu0 %v334
    %516 = vmatprep.subr.mxu0 0.0
    %517 = vmatpush1.msra.mxu0 %v339
    %518 = vmatprep.subr.mxu0 0.0
    %519 = vmatpush1.msra.mxu0 0.0
    %520 = vmatprep.subr.mxu0 0.0
    %521 = vmatpush1.msra.mxu0 0.0
    %522 = vmatprep.subr.mxu0 0.0
    %523 = vmatpush1.msra.mxu0 0.0
    %524 = vmatprep.subr.mxu0 0.0
    %525 = vmatpush1.msra.mxu0 0.0
    %526 = vmatprep.subr.mxu0 0.0
    %527 = vmatpush1.msra.mxu0 0.0
    %528 = vmatprep.subr.mxu0 0.0
    %529 = vmatpush1.msra.mxu0 0.0
    %530 = vmatprep.subr.mxu0 0.0
    %531 = vmatpush1.msra.mxu0 0.0
    %532 = vmatprep.subr.mxu0 0.0
    %533 = vmatpush1.msra.mxu0 0.0
    %534 = vmatprep.subr.mxu0 0.0
    %535 = vmatpush1.msra.mxu0 0.0
    %536 = vmatprep.subr.mxu0 0.0
    %537 = vmatpush1.msra.mxu0 0.0
    %538 = vmatprep.subr.mxu0 0.0
    %539 = vmatpush1.msra.mxu0 0.0
    %540 = vmatprep.subr.mxu0 0.0
    %541 = vmatpush1.msra.mxu0 0.0
    %542 = vmatprep.subr.mxu0 0.0
    %543 = vmatpush1.msra.mxu0 0.0
    %544 = vmatprep.subr.mxu0 0.0
    %545 = vmatpush1.msra.mxu0 0.0
    %546 = vmatprep.subr.mxu0 0.0
    %547 = vmatpush1.msra.mxu0 0.0
    %548 = vmatprep.subr.mxu0 0.0
    %549 = vmatpush1.msra.mxu0 0.0
    %550 = vmatprep.subr.mxu0 0.0
    %551 = vmatpush1.msra.mxu0 0.0
    %552 = vmatprep.subr.mxu0 0.0
    %553 = vmatpush1.msra.mxu0 0.0
    %554 = vmatprep.subr.mxu0 0.0
    %555 = vmatpush1.msra.mxu0 0.0
    %556 = vmatprep.subr.mxu0 0.0
    %557 = vmatpush1.msra.mxu0 0.0
    %558 = vmatprep.subr.mxu0 0.0
    %559 = vmatpush1.msra.mxu0 0.0
    %560 = vmatprep.subr.mxu0 0.0
    %561 = vmatpush1.msra.mxu0 0.0
    %562 = vmatprep.subr.mxu0 0.0
    %563 = vmatpush1.msra.mxu0 0.0
    %564 = vmatprep.subr.mxu0 0.0
    %565 = vmatpush1.msra.mxu0 0.0
    %566 = vmatprep.mubr.f32.mxu0 0.0
    %567 = vmatmul.mubr.f32.gmra.mrb[0].mxu0 %v479
    %v568 = vpop.f32.mrb[0].mxu0
    %v569 = vadd.f32 0.0, %v568
    %v570 = vpop.f32.mrb[0].mxu0
    %571 = vmatprep.mubr.f32.mxu0 0.0
    %572 = vmatmul.mubr.f32.gmra.mrb[0].mxu0 %v482
    %v573 = vpop.f32.mrb[0].mxu0
    %v574 = vadd.f32 0.0, %v573
    %v575 = vpop.f32.mrb[0].mxu0
    %576 = vmatprep.mubr.f32.mxu0 0.0
    %577 = vmatmul.mubr.f32.gmra.mrb[0].mxu0 %v485
    %v578 = vpop.f32.mrb[0].mxu0
    %v579 = vadd.f32 0.0, %v578
    %v580 = vpop.f32.mrb[0].mxu0
    %581 = vmatprep.mubr.f32.mxu0 0.0
    %582 = vmatmul.mubr.f32.gmra.mrb[0].mxu0 %v488
    %v583 = vpop.f32.mrb[0].mxu0
    %v584 = vadd.f32 0.0, %v583
    %v585 = vpop.f32.mrb[0].mxu0
    %586 = vmatprep.mubr.f32.mxu0 0.0
    %587 = vmatmul.mubr.f32.gmra.mrb[0].mxu0 %v491
    %v588 = vpop.f32.mrb[0].mxu0
    %v589 = vadd.f32 0.0, %v588
    %v590 = vpop.f32.mrb[0].mxu0
    %591 = vmatprep.mubr.f32.mxu0 0.0
    %592 = vmatmul.mubr.f32.gmra.mrb[0].mxu0 %v494
    %v593 = vpop.f32.mrb[0].mxu0
    %v594 = vadd.f32 0.0, %v593
    %v595 = vpop.f32.mrb[0].mxu0
    %596 = vmatprep.mubr.f32.mxu0 0.0
    %597 = vmatmul.mubr.f32.gmra.mrb[0].mxu0 %v497
    %v598 = vpop.f32.mrb[0].mxu0
    %v599 = vadd.f32 0.0, %v598
    %v600 = vpop.f32.mrb[0].mxu0
    %601 = vmatprep.mubr.f32.mxu0 0.0
    %602 = vmatmul.mubr.f32.gmra.mrb[0].mxu0 %v500
    %v603 = vpop.f32.mrb[0].mxu0
    %v604 = vadd.f32 0.0, %v603
    %v605 = vpop.f32.mrb[0].mxu0
    %606 = vdwg.mxu0
    %v607 = vld [vmem:[%s7] sm:$0x1]
    %v609 = vlaneseq
    %v610 = vshrl.u32 %v609, 7
    %v611 = vsub.s32 0, %v610
    %v612 = vrot.slane %v607, %v611
    %v615 = vsel %vm212, %v30, 0
    %v618 = vsel %vm212, %v31, 0
    %v621 = vsel %vm212, %v32, 0
    %v624 = vsel %vm212, %v33, 0
    %v627 = vsel %vm212, %v34, 0
    %v630 = vsel %vm212, %v35, 0
    %v633 = vsel %vm212, %v36, 0
    %v636 = vsel %vm212, %v37, 0
    %638 = vmatprep.subr.mxu0 0.0
    %639 = vmatpush1.msra.mxu0 %v569
    %640 = vmatprep.subr.mxu0 0.0
    %641 = vmatpush1.msra.mxu0 %v574
    %642 = vmatprep.subr.mxu0 0.0
    %643 = vmatpush1.msra.mxu0 %v579
    %644 = vmatprep.subr.mxu0 0.0
    %645 = vmatpush1.msra.mxu0 %v584
    %646 = vmatprep.subr.mxu0 0.0
    %647 = vmatpush1.msra.mxu0 %v589
    %648 = vmatprep.subr.mxu0 0.0
    %649 = vmatpush1.msra.mxu0 %v594
    %650 = vmatprep.subr.mxu0 0.0
    %651 = vmatpush1.msra.mxu0 %v599
    %652 = vmatprep.subr.mxu0 0.0
    %653 = vmatpush1.msra.mxu0 %v604
    %654 = vmatprep.subr.mxu0 0.0
    %655 = vmatpush1.msra.mxu0 0.0
    %656 = vmatprep.subr.mxu0 0.0
    %657 = vmatpush1.msra.mxu0 0.0
    %658 = vmatprep.subr.mxu0 0.0
    %659 = vmatpush1.msra.mxu0 0.0
    %660 = vmatprep.subr.mxu0 0.0
    %661 = vmatpush1.msra.mxu0 0.0
    %662 = vmatprep.subr.mxu0 0.0
    %663 = vmatpush1.msra.mxu0 0.0
    %664 = vmatprep.subr.mxu0 0.0
    %665 = vmatpush1.msra.mxu0 0.0
    %666 = vmatprep.subr.mxu0 0.0
    %667 = vmatpush1.msra.mxu0 0.0
    %668 = vmatprep.subr.mxu0 0.0
    %669 = vmatpush1.msra.mxu0 0.0
    %670 = vmatprep.subr.mxu0 0.0
    %671 = vmatpush1.msra.mxu0 0.0
    %672 = vmatprep.subr.mxu0 0.0
    %673 = vmatpush1.msra.mxu0 0.0
    %674 = vmatprep.subr.mxu0 0.0
    %675 = vmatpush1.msra.mxu0 0.0
    %676 = vmatprep.subr.mxu0 0.0
    %677 = vmatpush1.msra.mxu0 0.0
    %678 = vmatprep.subr.mxu0 0.0
    %679 = vmatpush1.msra.mxu0 0.0
    %680 = vmatprep.subr.mxu0 0.0
    %681 = vmatpush1.msra.mxu0 0.0
    %682 = vmatprep.subr.mxu0 0.0
    %683 = vmatpush1.msra.mxu0 0.0
    %684 = vmatprep.subr.mxu0 0.0
    %685 = vmatpush1.msra.mxu0 0.0
    %686 = vmatprep.subr.mxu0 0.0
    %687 = vmatpush1.msra.mxu0 0.0
    %688 = vmatprep.subr.mxu0 0.0
    %689 = vmatpush1.msra.mxu0 0.0
    %690 = vmatprep.subr.mxu0 0.0
    %691 = vmatpush1.msra.mxu0 0.0
    %692 = vmatprep.subr.mxu0 0.0
    %693 = vmatpush1.msra.mxu0 0.0
    %694 = vmatprep.subr.mxu0 0.0
    %695 = vmatpush1.msra.mxu0 0.0
    %696 = vmatprep.subr.mxu0 0.0
    %697 = vmatpush1.msra.mxu0 0.0
    %698 = vmatprep.subr.mxu0 0.0
    %699 = vmatpush1.msra.mxu0 0.0
    %700 = vmatprep.subr.mxu0 0.0
    %701 = vmatpush1.msra.mxu0 0.0
    %702 = vmatprep.mubr.f32.mxu0 0.0
    %703 = vmatmul.mubr.f32.gmra.mrb[0].mxu0 %v615
    %v704 = vpop.f32.mrb[0].mxu0
    %v705 = vadd.f32 %v612, %v704
    %v706 = vpop.f32.mrb[0].mxu0
    %707 = vmatprep.mubr.f32.mxu0 0.0
    %708 = vmatmul.mubr.f32.gmra.mrb[0].mxu0 %v618
    %v709 = vpop.f32.mrb[0].mxu0
    %v710 = vadd.f32 %v612, %v709
    %v711 = vpop.f32.mrb[0].mxu0
    %712 = vmatprep.mubr.f32.mxu0 0.0
    %713 = vmatmul.mubr.f32.gmra.mrb[0].mxu0 %v621
    %v714 = vpop.f32.mrb[0].mxu0
    %v715 = vadd.f32 %v612, %v714
    %v716 = vpop.f32.mrb[0].mxu0
    %717 = vmatprep.mubr.f32.mxu0 0.0
    %718 = vmatmul.mubr.f32.gmra.mrb[0].mxu0 %v624
    %v719 = vpop.f32.mrb[0].mxu0
    %v720 = vadd.f32 %v612, %v719
    %v721 = vpop.f32.mrb[0].mxu0
    %722 = vmatprep.mubr.f32.mxu0 0.0
    %723 = vmatmul.mubr.f32.gmra.mrb[0].mxu0 %v627
    %v724 = vpop.f32.mrb[0].mxu0
    %v725 = vadd.f32 %v612, %v724
    %v726 = vpop.f32.mrb[0].mxu0
    %727 = vmatprep.mubr.f32.mxu0 0.0
    %728 = vmatmul.mubr.f32.gmra.mrb[0].mxu0 %v630
    %v729 = vpop.f32.mrb[0].mxu0
    %v730 = vadd.f32 %v612, %v729
    %v731 = vpop.f32.mrb[0].mxu0
    %732 = vmatprep.mubr.f32.mxu0 0.0
    %733 = vmatmul.mubr.f32.gmra.mrb[0].mxu0 %v633
    %v734 = vpop.f32.mrb[0].mxu0
    %v735 = vadd.f32 %v612, %v734
    %v736 = vpop.f32.mrb[0].mxu0
    %737 = vmatprep.mubr.f32.mxu0 0.0
    %738 = vmatmul.mubr.f32.gmra.mrb[0].mxu0 %v636
    %v739 = vpop.f32.mrb[0].mxu0
    %v740 = vadd.f32 %v612, %v739
    %v741 = vpop.f32.mrb[0].mxu0
    %742 = vdwg.mxu0
    %743 = vst [vmem:[#allocation2] sm:$0xff] %v705
    %744 = vst [vmem:[#allocation2 + $0x8] sm:$0xff] %v710
    %745 = vst [vmem:[#allocation2 + $0x10] sm:$0xff] %v715
    %746 = vst [vmem:[#allocation2 + $0x18] sm:$0xff] %v720
    %747 = vst [vmem:[#allocation2 + $0x20] sm:$0xff] %v725
    %748 = vst [vmem:[#allocation2 + $0x28] sm:$0xff] %v730
    %749 = vst [vmem:[#allocation2 + $0x30] sm:$0xff] %v735
    %750 = vst [vmem:[#allocation2 + $0x38] sm:$0xff] %v740
    // Predicated region
    $region34: #{tpu_custom_call.1} parent=1 // pred_check
      _
    $region35: #{tpu_custom_call.1} parent=1 // pred_check_branch
      %752 = sbr.rel (0) target = $region37
    $region36: #{tpu_custom_call.1} parent=1 // pred_region
      %s754 = ssub.s32 1024, 1024
      %755 = vsyncadd [#allocation3], %s754
      %s756 = sshll.u32 [#allocation2], 4
      %s757 = int_to_ptr.vmem [resolvable:$true] %s756
      %762 = dma.vmem_to_hbm [thread:$0]  %s757, 1024, %s8, [#allocation3], 128, 128, 8
    $region37: #{tpu_custom_call.1} parent=1 // pred_fallthru
      _
    // Predicated region
    $region38: #{tpu_custom_call.1} parent=1 // pred_check
      _
    $region39: #{tpu_custom_call.1} parent=1 // pred_check_branch
      %764 = sbr.rel (0) target = $region41
    $region40: #{tpu_custom_call.1} parent=1 // pred_region
      %765 = dma.done [#allocation3], 1024
    $region41: #{tpu_custom_call.1} parent=1 // pred_fallthru
      _
    %766 = vsyncpa [#allocation3], 1

</llo_original>
